<compile_context>
chip_gen: v7x
topology: tpu7x:2x2x1
jax: 0.10.0
libtpu: 0.0.40
codegen_flags: <defaults>
</compile_context>

<pallas_src>
import functools
import math

import jax
import jax.numpy as jnp
from jax import lax
from jax.experimental import pallas as pl
from jax.experimental.pallas import tpu as pltpu


def _gem_kernel_traced(p_ref, x_ref, o_ref, *, eps, log_inv_hw):
    # p_ref: (1,) f32 in SMEM; x_ref: (N_TILE, HW, C_TILE); o_ref: (N_TILE, C_TILE).
    p = p_ref[0]
    x = jnp.maximum(x_ref[...].astype(jnp.float32), eps)
    # x ** p with a traced exponent -> exp(p * log(x)); x >= eps > 0 so log is finite.
    xp = jnp.exp(p * jnp.log(x))
    s = jnp.sum(xp, axis=1)  # reduce the spatial (sublane) axis -> (N_TILE, C_TILE)
    # mean**(1/p) = exp((log(sum) + log(1/HW)) / p)
    o_ref[...] = jnp.exp((jnp.log(s) + log_inv_hw) / p).astype(o_ref.dtype)


def _gem_kernel_static(x_ref, o_ref, *, eps, inv_hw, p_int):
    # Frozen integer p: pure VPU multiplies for the per-element power (no EUP).
    x = jnp.maximum(x_ref[...].astype(jnp.float32), eps)
    xp = lax.integer_pow(x, p_int)
    mean = jnp.sum(xp, axis=1) * inv_hw
    o_ref[...] = (mean ** (1.0 / float(p_int))).astype(o_ref.dtype)


def _pick_c_tile(C):
    # Lane-dense channel tiles that divide C; otherwise take all of C (legal since
    # a block dim equal to the full array dim satisfies the (8,128) rule).
    for t in (1024, 512, 256, 128):
        if C % t == 0:
            return t
    return C


def gem(x, p, eps=1e-6):
    """GeM pooling. x: (N, C, H, W) -> (N, C, 1, 1)."""
    N, C, H, W = x.shape
    HW = H * W

    # Channels-on-lanes layout: (N, C, H, W) -> (N, HW, C).
    xt = jnp.transpose(x.reshape(N, C, HW), (0, 2, 1))

    c_tile = _pick_c_tile(C)
    n_c_tiles = C // c_tile  # _pick_c_tile guarantees divisibility (or c_tile == C)

    # ~2 MiB per (double-buffered) input block: big enough to amortize the
    # ~0.35 us per-grid-step overhead, small enough for v7x scoped VMEM.
    itemsize = jnp.dtype(x.dtype).itemsize
    bytes_per_n = HW * c_tile * itemsize
    n_tile = int(max(1, min(N, (2 * 1024 * 1024) // max(1, bytes_per_n))))
    if n_tile >= N:
        n_tile = N
    elif N >= 8:
        # output block's second-minor dim must be a multiple of 8 (f32 sublane)
        # unless it spans the full array dim.
        n_tile = max(8, (n_tile // 8) * 8)
    else:
        n_tile = N

    grid = (pl.cdiv(N, n_tile), n_c_tiles)

    x_spec = pl.BlockSpec((n_tile, HW, c_tile), lambda n, c: (n, 0, c))
    o_spec = pl.BlockSpec((n_tile, c_tile), lambda n, c: (n, c))

    static_p = None
    if isinstance(p, (int, float)) and float(p) == int(p) and 1 <= int(p) <= 16:
        static_p = int(p)

    if static_p is not None:
        kernel = functools.partial(
            _gem_kernel_static, eps=float(eps), inv_hw=1.0 / float(HW), p_int=static_p
        )
        in_specs = [x_spec]
        args = (xt,)
        transcendentals = 2 * N * C  # epilogue root only
    else:
        kernel = functools.partial(
            _gem_kernel_traced, eps=float(eps), log_inv_hw=float(-math.log(HW))
        )
        in_specs = [pl.BlockSpec(memory_space=pltpu.MemorySpace.SMEM), x_spec]
        args = (jnp.asarray(p, jnp.float32).reshape(1), xt)
        transcendentals = 2 * N * C * HW  # log + exp per element

    out = pl.pallas_call(
        kernel,
        out_shape=jax.ShapeDtypeStruct((N, C), x.dtype),
        grid=grid,
        in_specs=in_specs,
        out_specs=o_spec,
        compiler_params=pltpu.CompilerParams(
            dimension_semantics=("parallel", "parallel")
        ),
        cost_estimate=pl.CostEstimate(
            flops=4 * N * C * HW,
            transcendentals=transcendentals,
            bytes_accessed=N * C * HW * itemsize + N * C * itemsize,
        ),
    )(*args)

    return out.reshape(N, C, 1, 1)


def gem_ref(x, p, eps=1e-6):
    """Pure-JAX reference matching the PyTorch module."""
    xc = jnp.maximum(x, eps)
    pooled = jnp.mean(xc ** p, axis=(-2, -1), keepdims=True)
    return pooled ** (1.0 / p)


if __name__ == "__main__":
    key = jax.random.PRNGKey(0)
    N, C, H, W = 2, 4, 16, 16
    x = jax.random.normal(key, (N, C, H, W), dtype=jnp.float32)

    # Parameter init per module __init__: p = ones(1) * 3 (learnable -> traced path).
    p = jnp.ones((1,), jnp.float32) * 3.0

    out = gem(x, p)
    jax.block_until_ready(out)

    ref = gem_ref(x, p)
    assert out.shape == (N, C, 1, 1)
    assert jnp.allclose(out, ref, rtol=1e-4, atol=1e-5), (out, ref)

    # Static integer-p fast path (no per-element transcendentals).
    out_static = gem(x, 3.0)
    jax.block_until_ready(out_static)
    assert jnp.allclose(out_static, ref, rtol=1e-4, atol=1e-5), (out_static, ref)

    print("KERNEL_OK")
</pallas_src>

<mosaic_0001>
module attributes {stable_mosaic.version = 11 : i64} {
  func.func @_gem_kernel_traced(%arg0: i32, %arg1: i32, %arg2: memref<1xf32, #tpu.memory_space<smem>>, %arg3: memref<2x256x4xf32, #tpu.memory_space<vmem>>, %arg4: memref<2x4xf32, #tpu.memory_space<vmem>>) attributes {dimension_semantics = [#tpu.dimension_semantics<parallel>, #tpu.dimension_semantics<parallel>], iteration_bounds = array<i64: 1, 1>, scalar_prefetch = 0 : i64, scratch_operands = 0 : i64, tpu.core_type = #tpu.core_type<tc>, window_params = [{transform_indices = @transform_0, window_bounds = array<i64: 1>}, {transform_indices = @transform_1, window_bounds = array<i64: 2, 256, 4>}, {transform_indices = @transform_2, window_bounds = array<i64: 2, 4>}]} {
    %c0 = arith.constant 0 : index
    %0 = memref.load %arg2[%c0] : memref<1xf32, #tpu.memory_space<smem>>
    %c0_0 = arith.constant 0 : index
    %c0_1 = arith.constant 0 : index
    %c0_2 = arith.constant 0 : index
    %1 = vector.load %arg3[%c0_0, %c0_1, %c0_2] : memref<2x256x4xf32, #tpu.memory_space<vmem>>, vector<2x256x4xf32>
    %cst = arith.constant 9.99999997E-7 : f32
    %2 = vector.broadcast %cst : f32 to vector<2x256x4xf32>
    %3 = arith.maximumf %1, %2 : vector<2x256x4xf32>
    %4 = math.log %3 : vector<2x256x4xf32>
    %5 = vector.broadcast %0 : f32 to vector<2x256x4xf32>
    %6 = arith.mulf %5, %4 : vector<2x256x4xf32>
    %7 = math.exp %6 : vector<2x256x4xf32>
    %cst_3 = arith.constant dense<0.000000e+00> : vector<2x4xf32>
    %8 = vector.multi_reduction <add>, %7, %cst_3 [1] : vector<2x256x4xf32> to vector<2x4xf32>
    %9 = math.log %8 : vector<2x4xf32>
    %cst_4 = arith.constant -5.54517746 : f32
    %10 = vector.broadcast %cst_4 : f32 to vector<2x4xf32>
    %11 = arith.addf %9, %10 : vector<2x4xf32>
    %12 = vector.broadcast %0 : f32 to vector<2x4xf32>
    %13 = arith.divf %11, %12 : vector<2x4xf32>
    %14 = math.exp %13 : vector<2x4xf32>
    %c0_5 = arith.constant 0 : index
    %c0_6 = arith.constant 0 : index
    %15 = vector.load %arg4[%c0_5, %c0_6] : memref<2x4xf32, #tpu.memory_space<vmem>>, vector<2x4xf32>
    tpu.vector_store %arg4[%c0_5, %c0_6], %14 {strides = array<i32>} : memref<2x4xf32, #tpu.memory_space<vmem>>, vector<2x4xf32>,
    return
  }
  func.func @transform_0(%arg0: i32, %arg1: i32) -> i32 {
    %c0_i32 = arith.constant 0 : i32
    %c0_i32_0 = arith.constant 0 : i32
    return %c0_i32 : i32
  }
  func.func @transform_1(%arg0: i32, %arg1: i32) -> (i32, i32, i32) {
    %c0_i32 = arith.constant 0 : i32
    %c0_i32_0 = arith.constant 0 : i32
    return %arg0, %c0_i32, %arg1 : i32, i32, i32
  }
  func.func @transform_2(%arg0: i32, %arg1: i32) -> (i32, i32) {
    %c0_i32 = arith.constant 0 : i32
    return %arg0, %arg1 : i32, i32
  }
}

</mosaic_0001>

<llo_original>
// kernel: tpu_custom_call.1
$region0: #{tpu_custom_call.1}
  #allocation0 [shape = 'u32[]', space=smem, size = 0x4, offset = 0x4, fixed_abs, tag = 'smem constant byte address 0x4 - core index']
  #allocation1 [shape = 'u32[144,128]{1,0:T(1,128)}', space=vmem, size = 0x12000, scoped, tag = 'internal scratch']
  #allocation2 [shape = 'f32[1]{0:T(128)S(6)}', space=smem, size = 0x200, scoped, tag = 'scoped memory for tpu_custom_call.1']
  %s0 = inlined_call_operand.<no memory space> [shape: f32[1], index: 0, kind: input, shape index: {}]
  %s1 = inlined_call_operand.vmem [shape: f32[2,256,4], index: 1, kind: input, shape index: {}]
  %s2 = inlined_call_operand.hbm [shape: f32[2,4], index: 2, kind: output, shape index: {}]
  %s3 = sld [smem:[#allocation0]]
  $region18: #{tpu_custom_call.1} parent=0
    _
  %s5 = ssub.s32 1, %s3
  %s6 = scalar_select 0, %s5, %s3
  %7 = sst [smem:[#allocation2]] %s0
  $region1: #{tpu_custom_call.1} parent=0
    #allocation3 [shape = 'u8[1024]{0}', space=vmem, size = 0x400, scoped, tag = 'output window, operand 0, single buffered']
    #allocation4 [shape = 's32[1]{0}', space=sflag, size = 0x4, scoped, tag = 'scoped memory for tpu_custom_call.1']
    %8 = vsyncpa [#allocation4], 0
    // Predicated region
    $region2: #{tpu_custom_call.1} parent=1 // pred_check
      _
    $region3: #{tpu_custom_call.1} parent=1 // pred_check_branch
      %10 = sbr.rel (0) target = $region5
    $region4: #{tpu_custom_call.1} parent=1 // pred_region
      _
    $region5: #{tpu_custom_call.1} parent=1 // pred_fallthru
      _
    // Predicated region
    $region6: #{tpu_custom_call.1} parent=1 // pred_check
      _
    $region7: #{tpu_custom_call.1} parent=1 // pred_check_branch
      %12 = sbr.rel (0) target = $region9
    $region8: #{tpu_custom_call.1} parent=1 // pred_region
      _
    $region9: #{tpu_custom_call.1} parent=1 // pred_fallthru
      _
    %s13 = sld [smem:[#allocation2]]
    %v14 = vld [vmem:[%s1] sm:$0xff]
    %v15 = vld [vmem:[%s1 + $0x8] sm:$0xff]
    %v16 = vld [vmem:[%s1 + $0x10] sm:$0xff]
    %v17 = vld [vmem:[%s1 + $0x18] sm:$0xff]
    %v18 = vld [vmem:[%s1 + $0x20] sm:$0xff]
    %v19 = vld [vmem:[%s1 + $0x28] sm:$0xff]
    %v20 = vld [vmem:[%s1 + $0x30] sm:$0xff]
    %v21 = vld [vmem:[%s1 + $0x38] sm:$0xff]
    %v22 = vld [vmem:[%s1 + $0x40] sm:$0xff]
    %v23 = vld [vmem:[%s1 + $0x48] sm:$0xff]
    %v24 = vld [vmem:[%s1 + $0x50] sm:$0xff]
    %v25 = vld [vmem:[%s1 + $0x58] sm:$0xff]
    %v26 = vld [vmem:[%s1 + $0x60] sm:$0xff]
    %v27 = vld [vmem:[%s1 + $0x68] sm:$0xff]
    %v28 = vld [vmem:[%s1 + $0x70] sm:$0xff]
    %v29 = vld [vmem:[%s1 + $0x78] sm:$0xff]
    %v30 = vld [vmem:[%s1 + $0x80] sm:$0xff]
    %v31 = vld [vmem:[%s1 + $0x88] sm:$0xff]
    %v32 = vld [vmem:[%s1 + $0x90] sm:$0xff]
    %v33 = vld [vmem:[%s1 + $0x98] sm:$0xff]
    %v34 = vld [vmem:[%s1 + $0xa0] sm:$0xff]
    %v35 = vld [vmem:[%s1 + $0xa8] sm:$0xff]
    %v36 = vld [vmem:[%s1 + $0xb0] sm:$0xff]
    %v37 = vld [vmem:[%s1 + $0xb8] sm:$0xff]
    %v38 = vld [vmem:[%s1 + $0xc0] sm:$0xff]
    %v39 = vld [vmem:[%s1 + $0xc8] sm:$0xff]
    %v40 = vld [vmem:[%s1 + $0xd0] sm:$0xff]
    %v41 = vld [vmem:[%s1 + $0xd8] sm:$0xff]
    %v42 = vld [vmem:[%s1 + $0xe0] sm:$0xff]
    %v43 = vld [vmem:[%s1 + $0xe8] sm:$0xff]
    %v44 = vld [vmem:[%s1 + $0xf0] sm:$0xff]
    %v45 = vld [vmem:[%s1 + $0xf8] sm:$0xff]
    %v46 = vld [vmem:[%s1 + $0x100] sm:$0xff]
    %v47 = vld [vmem:[%s1 + $0x108] sm:$0xff]
    %v48 = vld [vmem:[%s1 + $0x110] sm:$0xff]
    %v49 = vld [vmem:[%s1 + $0x118] sm:$0xff]
    %v50 = vld [vmem:[%s1 + $0x120] sm:$0xff]
    %v51 = vld [vmem:[%s1 + $0x128] sm:$0xff]
    %v52 = vld [vmem:[%s1 + $0x130] sm:$0xff]
    %v53 = vld [vmem:[%s1 + $0x138] sm:$0xff]
    %v54 = vld [vmem:[%s1 + $0x140] sm:$0xff]
    %v55 = vld [vmem:[%s1 + $0x148] sm:$0xff]
    %v56 = vld [vmem:[%s1 + $0x150] sm:$0xff]
    %v57 = vld [vmem:[%s1 + $0x158] sm:$0xff]
    %v58 = vld [vmem:[%s1 + $0x160] sm:$0xff]
    %v59 = vld [vmem:[%s1 + $0x168] sm:$0xff]
    %v60 = vld [vmem:[%s1 + $0x170] sm:$0xff]
    %v61 = vld [vmem:[%s1 + $0x178] sm:$0xff]
    %v62 = vld [vmem:[%s1 + $0x180] sm:$0xff]
    %v63 = vld [vmem:[%s1 + $0x188] sm:$0xff]
    %v64 = vld [vmem:[%s1 + $0x190] sm:$0xff]
    %v65 = vld [vmem:[%s1 + $0x198] sm:$0xff]
    %v66 = vld [vmem:[%s1 + $0x1a0] sm:$0xff]
    %v67 = vld [vmem:[%s1 + $0x1a8] sm:$0xff]
    %v68 = vld [vmem:[%s1 + $0x1b0] sm:$0xff]
    %v69 = vld [vmem:[%s1 + $0x1b8] sm:$0xff]
    %v70 = vld [vmem:[%s1 + $0x1c0] sm:$0xff]
    %v71 = vld [vmem:[%s1 + $0x1c8] sm:$0xff]
    %v72 = vld [vmem:[%s1 + $0x1d0] sm:$0xff]
    %v73 = vld [vmem:[%s1 + $0x1d8] sm:$0xff]
    %v74 = vld [vmem:[%s1 + $0x1e0] sm:$0xff]
    %v75 = vld [vmem:[%s1 + $0x1e8] sm:$0xff]
    %v76 = vld [vmem:[%s1 + $0x1f0] sm:$0xff]
    %v77 = vld [vmem:[%s1 + $0x1f8] sm:$0xff]
    %v78 = vmax.f32 %v14, 1e-06
    %v79 = vmax.f32 %v15, 1e-06
    %v80 = vmax.f32 %v16, 1e-06
    %v81 = vmax.f32 %v17, 1e-06
    %v82 = vmax.f32 %v18, 1e-06
    %v83 = vmax.f32 %v19, 1e-06
    %v84 = vmax.f32 %v20, 1e-06
    %v85 = vmax.f32 %v21, 1e-06
    %v86 = vmax.f32 %v22, 1e-06
    %v87 = vmax.f32 %v23, 1e-06
    %v88 = vmax.f32 %v24, 1e-06
    %v89 = vmax.f32 %v25, 1e-06
    %v90 = vmax.f32 %v26, 1e-06
    %v91 = vmax.f32 %v27, 1e-06
    %v92 = vmax.f32 %v28, 1e-06
    %v93 = vmax.f32 %v29, 1e-06
    %v94 = vmax.f32 %v30, 1e-06
    %v95 = vmax.f32 %v31, 1e-06
    %v96 = vmax.f32 %v32, 1e-06
    %v97 = vmax.f32 %v33, 1e-06
    %v98 = vmax.f32 %v34, 1e-06
    %v99 = vmax.f32 %v35, 1e-06
    %v100 = vmax.f32 %v36, 1e-06
    %v101 = vmax.f32 %v37, 1e-06
    %v102 = vmax.f32 %v38, 1e-06
    %v103 = vmax.f32 %v39, 1e-06
    %v104 = vmax.f32 %v40, 1e-06
    %v105 = vmax.f32 %v41, 1e-06
    %v106 = vmax.f32 %v42, 1e-06
    %v107 = vmax.f32 %v43, 1e-06
    %v108 = vmax.f32 %v44, 1e-06
    %v109 = vmax.f32 %v45, 1e-06
    %v110 = vmax.f32 %v46, 1e-06
    %v111 = vmax.f32 %v47, 1e-06
    %v112 = vmax.f32 %v48, 1e-06
    %v113 = vmax.f32 %v49, 1e-06
    %v114 = vmax.f32 %v50, 1e-06
    %v115 = vmax.f32 %v51, 1e-06
    %v116 = vmax.f32 %v52, 1e-06
    %v117 = vmax.f32 %v53, 1e-06
    %v118 = vmax.f32 %v54, 1e-06
    %v119 = vmax.f32 %v55, 1e-06
    %v120 = vmax.f32 %v56, 1e-06
    %v121 = vmax.f32 %v57, 1e-06
    %v122 = vmax.f32 %v58, 1e-06
    %v123 = vmax.f32 %v59, 1e-06
    %v124 = vmax.f32 %v60, 1e-06
    %v125 = vmax.f32 %v61, 1e-06
    %v126 = vmax.f32 %v62, 1e-06
    %v127 = vmax.f32 %v63, 1e-06
    %v128 = vmax.f32 %v64, 1e-06
    %v129 = vmax.f32 %v65, 1e-06
    %v130 = vmax.f32 %v66, 1e-06
    %v131 = vmax.f32 %v67, 1e-06
    %v132 = vmax.f32 %v68, 1e-06
    %v133 = vmax.f32 %v69, 1e-06
    %v134 = vmax.f32 %v70, 1e-06
    %v135 = vmax.f32 %v71, 1e-06
    %v136 = vmax.f32 %v72, 1e-06
    %v137 = vmax.f32 %v73, 1e-06
    %v138 = vmax.f32 %v74, 1e-06
    %v139 = vmax.f32 %v75, 1e-06
    %v140 = vmax.f32 %v76, 1e-06
    %v141 = vmax.f32 %v77, 1e-06
    %v142 = vlog2.pop %v78
    %v143 = vmul.f32 %v142, 0.6931472
    %v144 = vlog2.pop %v79
    %v145 = vmul.f32 %v144, 0.6931472
    %v146 = vlog2.pop %v80
    %v147 = vmul.f32 %v146, 0.6931472
    %v148 = vlog2.pop %v81
    %v149 = vmul.f32 %v148, 0.6931472
    %v150 = vlog2.pop %v82
    %v151 = vmul.f32 %v150, 0.6931472
    %v152 = vlog2.pop %v83
    %v153 = vmul.f32 %v152, 0.6931472
    %v154 = vlog2.pop %v84
    %v155 = vmul.f32 %v154, 0.6931472
    %v156 = vlog2.pop %v85
    %v157 = vmul.f32 %v156, 0.6931472
    %v158 = vlog2.pop %v86
    %v159 = vmul.f32 %v158, 0.6931472
    %v160 = vlog2.pop %v87
    %v161 = vmul.f32 %v160, 0.6931472
    %v162 = vlog2.pop %v88
    %v163 = vmul.f32 %v162, 0.6931472
    %v164 = vlog2.pop %v89
    %v165 = vmul.f32 %v164, 0.6931472
    %v166 = vlog2.pop %v90
    %v167 = vmul.f32 %v166, 0.6931472
    %v168 = vlog2.pop %v91
    %v169 = vmul.f32 %v168, 0.6931472
    %v170 = vlog2.pop %v92
    %v171 = vmul.f32 %v170, 0.6931472
    %v172 = vlog2.pop %v93
    %v173 = vmul.f32 %v172, 0.6931472
    %v174 = vlog2.pop %v94
    %v175 = vmul.f32 %v174, 0.6931472
    %v176 = vlog2.pop %v95
    %v177 = vmul.f32 %v176, 0.6931472
    %v178 = vlog2.pop %v96
    %v179 = vmul.f32 %v178, 0.6931472
    %v180 = vlog2.pop %v97
    %v181 = vmul.f32 %v180, 0.6931472
    %v182 = vlog2.pop %v98
    %v183 = vmul.f32 %v182, 0.6931472
    %v184 = vlog2.pop %v99
    %v185 = vmul.f32 %v184, 0.6931472
    %v186 = vlog2.pop %v100
    %v187 = vmul.f32 %v186, 0.6931472
    %v188 = vlog2.pop %v101
    %v189 = vmul.f32 %v188, 0.6931472
    %v190 = vlog2.pop %v102
    %v191 = vmul.f32 %v190, 0.6931472
    %v192 = vlog2.pop %v103
    %v193 = vmul.f32 %v192, 0.6931472
    %v194 = vlog2.pop %v104
    %v195 = vmul.f32 %v194, 0.6931472
    %v196 = vlog2.pop %v105
    %v197 = vmul.f32 %v196, 0.6931472
    %v198 = vlog2.pop %v106
    %v199 = vmul.f32 %v198, 0.6931472
    %v200 = vlog2.pop %v107
    %v201 = vmul.f32 %v200, 0.6931472
    %v202 = vlog2.pop %v108
    %v203 = vmul.f32 %v202, 0.6931472
    %v204 = vlog2.pop %v109
    %v205 = vmul.f32 %v204, 0.6931472
    %v206 = vlog2.pop %v110
    %v207 = vmul.f32 %v206, 0.6931472
    %v208 = vlog2.pop %v111
    %v209 = vmul.f32 %v208, 0.6931472
    %v210 = vlog2.pop %v112
    %v211 = vmul.f32 %v210, 0.6931472
    %v212 = vlog2.pop %v113
    %v213 = vmul.f32 %v212, 0.6931472
    %v214 = vlog2.pop %v114
    %v215 = vmul.f32 %v214, 0.6931472
    %v216 = vlog2.pop %v115
    %v217 = vmul.f32 %v216, 0.6931472
    %v218 = vlog2.pop %v116
    %v219 = vmul.f32 %v218, 0.6931472
    %v220 = vlog2.pop %v117
    %v221 = vmul.f32 %v220, 0.6931472
    %v222 = vlog2.pop %v118
    %v223 = vmul.f32 %v222, 0.6931472
    %v224 = vlog2.pop %v119
    %v225 = vmul.f32 %v224, 0.6931472
    %v226 = vlog2.pop %v120
    %v227 = vmul.f32 %v226, 0.6931472
    %v228 = vlog2.pop %v121
    %v229 = vmul.f32 %v228, 0.6931472
    %v230 = vlog2.pop %v122
    %v231 = vmul.f32 %v230, 0.6931472
    %v232 = vlog2.pop %v123
    %v233 = vmul.f32 %v232, 0.6931472
    %v234 = vlog2.pop %v124
    %v235 = vmul.f32 %v234, 0.6931472
    %v236 = vlog2.pop %v125
    %v237 = vmul.f32 %v236, 0.6931472
    %v238 = vlog2.pop %v126
    %v239 = vmul.f32 %v238, 0.6931472
    %v240 = vlog2.pop %v127
    %v241 = vmul.f32 %v240, 0.6931472
    %v242 = vlog2.pop %v128
    %v243 = vmul.f32 %v242, 0.6931472
    %v244 = vlog2.pop %v129
    %v245 = vmul.f32 %v244, 0.6931472
    %v246 = vlog2.pop %v130
    %v247 = vmul.f32 %v246, 0.6931472
    %v248 = vlog2.pop %v131
    %v249 = vmul.f32 %v248, 0.6931472
    %v250 = vlog2.pop %v132
    %v251 = vmul.f32 %v250, 0.6931472
    %v252 = vlog2.pop %v133
    %v253 = vmul.f32 %v252, 0.6931472
    %v254 = vlog2.pop %v134
    %v255 = vmul.f32 %v254, 0.6931472
    %v256 = vlog2.pop %v135
    %v257 = vmul.f32 %v256, 0.6931472
    %v258 = vlog2.pop %v136
    %v259 = vmul.f32 %v258, 0.6931472
    %v260 = vlog2.pop %v137
    %v261 = vmul.f32 %v260, 0.6931472
    %v262 = vlog2.pop %v138
    %v263 = vmul.f32 %v262, 0.6931472
    %v264 = vlog2.pop %v139
    %v265 = vmul.f32 %v264, 0.6931472
    %v266 = vlog2.pop %v140
    %v267 = vmul.f32 %v266, 0.6931472
    %v268 = vlog2.pop %v141
    %v269 = vmul.f32 %v268, 0.6931472
    %v270 = vstv %s13
    %v271 = vmul.f32 %v270, %v143
    %v272 = vmul.f32 %v270, %v145
    %v273 = vmul.f32 %v270, %v147
    %v274 = vmul.f32 %v270, %v149
    %v275 = vmul.f32 %v270, %v151
    %v276 = vmul.f32 %v270, %v153
    %v277 = vmul.f32 %v270, %v155
    %v278 = vmul.f32 %v270, %v157
    %v279 = vmul.f32 %v270, %v159
    %v280 = vmul.f32 %v270, %v161
    %v281 = vmul.f32 %v270, %v163
    %v282 = vmul.f32 %v270, %v165
    %v283 = vmul.f32 %v270, %v167
    %v284 = vmul.f32 %v270, %v169
    %v285 = vmul.f32 %v270, %v171
    %v286 = vmul.f32 %v270, %v173
    %v287 = vmul.f32 %v270, %v175
    %v288 = vmul.f32 %v270, %v177
    %v289 = vmul.f32 %v270, %v179
    %v290 = vmul.f32 %v270, %v181
    %v291 = vmul.f32 %v270, %v183
    %v292 = vmul.f32 %v270, %v185
    %v293 = vmul.f32 %v270, %v187
    %v294 = vmul.f32 %v270, %v189
    %v295 = vmul.f32 %v270, %v191
    %v296 = vmul.f32 %v270, %v193
    %v297 = vmul.f32 %v270, %v195
    %v298 = vmul.f32 %v270, %v197
    %v299 = vmul.f32 %v270, %v199
    %v300 = vmul.f32 %v270, %v201
    %v301 = vmul.f32 %v270, %v203
    %v302 = vmul.f32 %v270, %v205
    %v303 = vmul.f32 %v270, %v207
    %v304 = vmul.f32 %v270, %v209
    %v305 = vmul.f32 %v270, %v211
    %v306 = vmul.f32 %v270, %v213
    %v307 = vmul.f32 %v270, %v215
    %v308 = vmul.f32 %v270, %v217
    %v309 = vmul.f32 %v270, %v219
    %v310 = vmul.f32 %v270, %v221
    %v311 = vmul.f32 %v270, %v223
    %v312 = vmul.f32 %v270, %v225
    %v313 = vmul.f32 %v270, %v227
    %v314 = vmul.f32 %v270, %v229
    %v315 = vmul.f32 %v270, %v231
    %v316 = vmul.f32 %v270, %v233
    %v317 = vmul.f32 %v270, %v235
    %v318 = vmul.f32 %v270, %v237
    %v319 = vmul.f32 %v270, %v239
    %v320 = vmul.f32 %v270, %v241
    %v321 = vmul.f32 %v270, %v243
    %v322 = vmul.f32 %v270, %v245
    %v323 = vmul.f32 %v270, %v247
    %v324 = vmul.f32 %v270, %v249
    %v325 = vmul.f32 %v270, %v251
    %v326 = vmul.f32 %v270, %v253
    %v327 = vmul.f32 %v270, %v255
    %v328 = vmul.f32 %v270, %v257
    %v329 = vmul.f32 %v270, %v259
    %v330 = vmul.f32 %v270, %v261
    %v331 = vmul.f32 %v270, %v263
    %v332 = vmul.f32 %v270, %v265
    %v333 = vmul.f32 %v270, %v267
    %v334 = vmul.f32 %v270, %v269
    %v335 = vmul.f32 %v271, 1.442695
    %v336 = vpow.pop %v335
    %v337 = vmul.f32 %v272, 1.442695
    %v338 = vpow.pop %v337
    %v339 = vmul.f32 %v273, 1.442695
    %v340 = vpow.pop %v339
    %v341 = vmul.f32 %v274, 1.442695
    %v342 = vpow.pop %v341
    %v343 = vmul.f32 %v275, 1.442695
    %v344 = vpow.pop %v343
    %v345 = vmul.f32 %v276, 1.442695
    %v346 = vpow.pop %v345
    %v347 = vmul.f32 %v277, 1.442695
    %v348 = vpow.pop %v347
    %v349 = vmul.f32 %v278, 1.442695
    %v350 = vpow.pop %v349
    %v351 = vmul.f32 %v279, 1.442695
    %v352 = vpow.pop %v351
    %v353 = vmul.f32 %v280, 1.442695
    %v354 = vpow.pop %v353
    %v355 = vmul.f32 %v281, 1.442695
    %v356 = vpow.pop %v355
    %v357 = vmul.f32 %v282, 1.442695
    %v358 = vpow.pop %v357
    %v359 = vmul.f32 %v283, 1.442695
    %v360 = vpow.pop %v359
    %v361 = vmul.f32 %v284, 1.442695
    %v362 = vpow.pop %v361
    %v363 = vmul.f32 %v285, 1.442695
    %v364 = vpow.pop %v363
    %v365 = vmul.f32 %v286, 1.442695
    %v366 = vpow.pop %v365
    %v367 = vmul.f32 %v287, 1.442695
    %v368 = vpow.pop %v367
    %v369 = vmul.f32 %v288, 1.442695
    %v370 = vpow.pop %v369
    %v371 = vmul.f32 %v289, 1.442695
    %v372 = vpow.pop %v371
    %v373 = vmul.f32 %v290, 1.442695
    %v374 = vpow.pop %v373
    %v375 = vmul.f32 %v291, 1.442695
    %v376 = vpow.pop %v375
    %v377 = vmul.f32 %v292, 1.442695
    %v378 = vpow.pop %v377
    %v379 = vmul.f32 %v293, 1.442695
    %v380 = vpow.pop %v379
    %v381 = vmul.f32 %v294, 1.442695
    %v382 = vpow.pop %v381
    %v383 = vmul.f32 %v295, 1.442695
    %v384 = vpow.pop %v383
    %v385 = vmul.f32 %v296, 1.442695
    %v386 = vpow.pop %v385
    %v387 = vmul.f32 %v297, 1.442695
    %v388 = vpow.pop %v387
    %v389 = vmul.f32 %v298, 1.442695
    %v390 = vpow.pop %v389
    %v391 = vmul.f32 %v299, 1.442695
    %v392 = vpow.pop %v391
    %v393 = vmul.f32 %v300, 1.442695
    %v394 = vpow.pop %v393
    %v395 = vmul.f32 %v301, 1.442695
    %v396 = vpow.pop %v395
    %v397 = vmul.f32 %v302, 1.442695
    %v398 = vpow.pop %v397
    %v399 = vmul.f32 %v303, 1.442695
    %v400 = vpow.pop %v399
    %v401 = vmul.f32 %v304, 1.442695
    %v402 = vpow.pop %v401
    %v403 = vmul.f32 %v305, 1.442695
    %v404 = vpow.pop %v403
    %v405 = vmul.f32 %v306, 1.442695
    %v406 = vpow.pop %v405
    %v407 = vmul.f32 %v307, 1.442695
    %v408 = vpow.pop %v407
    %v409 = vmul.f32 %v308, 1.442695
    %v410 = vpow.pop %v409
    %v411 = vmul.f32 %v309, 1.442695
    %v412 = vpow.pop %v411
    %v413 = vmul.f32 %v310, 1.442695
    %v414 = vpow.pop %v413
    %v415 = vmul.f32 %v311, 1.442695
    %v416 = vpow.pop %v415
    %v417 = vmul.f32 %v312, 1.442695
    %v418 = vpow.pop %v417
    %v419 = vmul.f32 %v313, 1.442695
    %v420 = vpow.pop %v419
    %v421 = vmul.f32 %v314, 1.442695
    %v422 = vpow.pop %v421
    %v423 = vmul.f32 %v315, 1.442695
    %v424 = vpow.pop %v423
    %v425 = vmul.f32 %v316, 1.442695
    %v426 = vpow.pop %v425
    %v427 = vmul.f32 %v317, 1.442695
    %v428 = vpow.pop %v427
    %v429 = vmul.f32 %v318, 1.442695
    %v430 = vpow.pop %v429
    %v431 = vmul.f32 %v319, 1.442695
    %v432 = vpow.pop %v431
    %v433 = vmul.f32 %v320, 1.442695
    %v434 = vpow.pop %v433
    %v435 = vmul.f32 %v321, 1.442695
    %v436 = vpow.pop %v435
    %v437 = vmul.f32 %v322, 1.442695
    %v438 = vpow.pop %v437
    %v439 = vmul.f32 %v323, 1.442695
    %v440 = vpow.pop %v439
    %v441 = vmul.f32 %v324, 1.442695
    %v442 = vpow.pop %v441
    %v443 = vmul.f32 %v325, 1.442695
    %v444 = vpow.pop %v443
    %v445 = vmul.f32 %v326, 1.442695
    %v446 = vpow.pop %v445
    %v447 = vmul.f32 %v327, 1.442695
    %v448 = vpow.pop %v447
    %v449 = vmul.f32 %v328, 1.442695
    %v450 = vpow.pop %v449
    %v451 = vmul.f32 %v329, 1.442695
    %v452 = vpow.pop %v451
    %v453 = vmul.f32 %v330, 1.442695
    %v454 = vpow.pop %v453
    %v455 = vmul.f32 %v331, 1.442695
    %v456 = vpow.pop %v455
    %v457 = vmul.f32 %v332, 1.442695
    %v458 = vpow.pop %v457
    %v459 = vmul.f32 %v333, 1.442695
    %v460 = vpow.pop %v459
    %v461 = vmul.f32 %v334, 1.442695
    %v462 = vpow.pop %v461
    %vm463 = vcmask 31744
    %v464 = vsel %vm463, %v336, 0.0
    %v465 = vsel %vm463, %v338, 0.0
    %v466 = vadd.f32 %v464, %v465
    %v467 = vsel %vm463, %v340, 0.0
    %v468 = vadd.f32 %v466, %v467
    %v469 = vsel %vm463, %v342, 0.0
    %v470 = vadd.f32 %v468, %v469
    %v471 = vsel %vm463, %v344, 0.0
    %v472 = vadd.f32 %v470, %v471
    %v473 = vsel %vm463, %v346, 0.0
    %v474 = vadd.f32 %v472, %v473
    %v475 = vsel %vm463, %v348, 0.0
    %v476 = vadd.f32 %v474, %v475
    %v477 = vsel %vm463, %v350, 0.0
    %v478 = vadd.f32 %v476, %v477
    %v479 = vsel %vm463, %v352, 0.0
    %v480 = vadd.f32 %v478, %v479
    %v481 = vsel %vm463, %v354, 0.0
    %v482 = vadd.f32 %v480, %v481
    %v483 = vsel %vm463, %v356, 0.0
    %v484 = vadd.f32 %v482, %v483
    %v485 = vsel %vm463, %v358, 0.0
    %v486 = vadd.f32 %v484, %v485
    %v487 = vsel %vm463, %v360, 0.0
    %v488 = vadd.f32 %v486, %v487
    %v489 = vsel %vm463, %v362, 0.0
    %v490 = vadd.f32 %v488, %v489
    %v491 = vsel %vm463, %v364, 0.0
    %v492 = vadd.f32 %v490, %v491
    %v493 = vsel %vm463, %v366, 0.0
    %v494 = vadd.f32 %v492, %v493
    %v495 = vsel %vm463, %v368, 0.0
    %v496 = vadd.f32 %v494, %v495
    %v497 = vsel %vm463, %v370, 0.0
    %v498 = vadd.f32 %v496, %v497
    %v499 = vsel %vm463, %v372, 0.0
    %v500 = vadd.f32 %v498, %v499
    %v501 = vsel %vm463, %v374, 0.0
    %v502 = vadd.f32 %v500, %v501
    %v503 = vsel %vm463, %v376, 0.0
    %v504 = vadd.f32 %v502, %v503
    %v505 = vsel %vm463, %v378, 0.0
    %v506 = vadd.f32 %v504, %v505
    %v507 = vsel %vm463, %v380, 0.0
    %v508 = vadd.f32 %v506, %v507
    %v509 = vsel %vm463, %v382, 0.0
    %v510 = vadd.f32 %v508, %v509
    %v511 = vsel %vm463, %v384, 0.0
    %v512 = vadd.f32 %v510, %v511
    %v513 = vsel %vm463, %v386, 0.0
    %v514 = vadd.f32 %v512, %v513
    %v515 = vsel %vm463, %v388, 0.0
    %v516 = vadd.f32 %v514, %v515
    %v517 = vsel %vm463, %v390, 0.0
    %v518 = vadd.f32 %v516, %v517
    %v519 = vsel %vm463, %v392, 0.0
    %v520 = vadd.f32 %v518, %v519
    %v521 = vsel %vm463, %v394, 0.0
    %v522 = vadd.f32 %v520, %v521
    %v523 = vsel %vm463, %v396, 0.0
    %v524 = vadd.f32 %v522, %v523
    %v525 = vsel %vm463, %v398, 0.0
    %v526 = vadd.f32 %v524, %v525
    %v527 = vrot.slane %v526, 4
    %v528 = vadd.f32 %v526, %v527
    %v529 = vrot.slane %v528, 2
    %v530 = vadd.f32 %v528, %v529
    %v531 = vrot.slane %v530, 1
    %v532 = vadd.f32 %v530, %v531
    %v533 = vsel %vm463, %v400, 0.0
    %v534 = vsel %vm463, %v402, 0.0
    %v535 = vadd.f32 %v533, %v534
    %v536 = vsel %vm463, %v404, 0.0
    %v537 = vadd.f32 %v535, %v536
    %v538 = vsel %vm463, %v406, 0.0
    %v539 = vadd.f32 %v537, %v538
    %v540 = vsel %vm463, %v408, 0.0
    %v541 = vadd.f32 %v539, %v540
    %v542 = vsel %vm463, %v410, 0.0
    %v543 = vadd.f32 %v541, %v542
    %v544 = vsel %vm463, %v412, 0.0
    %v545 = vadd.f32 %v543, %v544
    %v546 = vsel %vm463, %v414, 0.0
    %v547 = vadd.f32 %v545, %v546
    %v548 = vsel %vm463, %v416, 0.0
    %v549 = vadd.f32 %v547, %v548
    %v550 = vsel %vm463, %v418, 0.0
    %v551 = vadd.f32 %v549, %v550
    %v552 = vsel %vm463, %v420, 0.0
    %v553 = vadd.f32 %v551, %v552
    %v554 = vsel %vm463, %v422, 0.0
    %v555 = vadd.f32 %v553, %v554
    %v556 = vsel %vm463, %v424, 0.0
    %v557 = vadd.f32 %v555, %v556
    %v558 = vsel %vm463, %v426, 0.0
    %v559 = vadd.f32 %v557, %v558
    %v560 = vsel %vm463, %v428, 0.0
    %v561 = vadd.f32 %v559, %v560
    %v562 = vsel %vm463, %v430, 0.0
    %v563 = vadd.f32 %v561, %v562
    %v564 = vsel %vm463, %v432, 0.0
    %v565 = vadd.f32 %v563, %v564
    %v566 = vsel %vm463, %v434, 0.0
    %v567 = vadd.f32 %v565, %v566
    %v568 = vsel %vm463, %v436, 0.0
    %v569 = vadd.f32 %v567, %v568
    %v570 = vsel %vm463, %v438, 0.0
    %v571 = vadd.f32 %v569, %v570
    %v572 = vsel %vm463, %v440, 0.0
    %v573 = vadd.f32 %v571, %v572
    %v574 = vsel %vm463, %v442, 0.0
    %v575 = vadd.f32 %v573, %v574
    %v576 = vsel %vm463, %v444, 0.0
    %v577 = vadd.f32 %v575, %v576
    %v578 = vsel %vm463, %v446, 0.0
    %v579 = vadd.f32 %v577, %v578
    %v580 = vsel %vm463, %v448, 0.0
    %v581 = vadd.f32 %v579, %v580
    %v582 = vsel %vm463, %v450, 0.0
    %v583 = vadd.f32 %v581, %v582
    %v584 = vsel %vm463, %v452, 0.0
    %v585 = vadd.f32 %v583, %v584
    %v586 = vsel %vm463, %v454, 0.0
    %v587 = vadd.f32 %v585, %v586
    %v588 = vsel %vm463, %v456, 0.0
    %v589 = vadd.f32 %v587, %v588
    %v590 = vsel %vm463, %v458, 0.0
    %v591 = vadd.f32 %v589, %v590
    %v592 = vsel %vm463, %v460, 0.0
    %v593 = vadd.f32 %v591, %v592
    %v594 = vsel %vm463, %v462, 0.0
    %v595 = vadd.f32 %v593, %v594
    %v596 = vrot.slane %v595, 4
    %v597 = vadd.f32 %v595, %v596
    %v598 = vrot.slane %v597, 2
    %v599 = vadd.f32 %v597, %v598
    %v600 = vrot.slane %v599, 1
    %v601 = vadd.f32 %v599, %v600
    %v602 = vlog2.pop %v532
    %v603 = vmul.f32 %v602, 0.6931472
    %v604 = vlog2.pop %v601
    %v605 = vmul.f32 %v604, 0.6931472
    %v606 = vadd.f32 %v603, -5.5451775
    %v607 = vadd.f32 %v605, -5.5451775
    %v608 = vrcp.pop %v270
    %v609 = vmul.f32 %v606, %v608
    %v610 = vmul.f32 %v607, %v608
    %v611 = vmul.f32 %v609, 1.442695
    %v612 = vpow.pop %v611
    %v613 = vmul.f32 %v610, 1.442695
    %v614 = vpow.pop %v613
    %vm617 = vcmask 1041409
    %v618 = vsel %vm617, %v614, %v612
    %vm620 = vcmask 25600
    %621 = vst.msk [vmem:[#allocation3] sm:$0x3] %vm620, %v618
    // Predicated region
    $region10: #{tpu_custom_call.1} parent=1 // pred_check
      _
    $region11: #{tpu_custom_call.1} parent=1 // pred_check_branch
      %623 = sbr.rel (0) target = $region13
    $region12: #{tpu_custom_call.1} parent=1 // pred_region
      %s625 = ssub.s32 32, 32
      %626 = vsyncadd [#allocation4], %s625
      %s628 = sshll.u32 [#allocation3], 4
      %s629 = int_to_ptr.vmem [resolvable:$true] %s628
      %631 = dma.vmem_to_hbm [thread:$0]  %s629, 32, %s2, [#allocation4]
    $region13: #{tpu_custom_call.1} parent=1 // pred_fallthru
      _
    // Predicated region
    $region14: #{tpu_custom_call.1} parent=1 // pred_check
      _
    $region15: #{tpu_custom_call.1} parent=1 // pred_check_branch
      %633 = sbr.rel (0) target = $region17
    $region16: #{tpu_custom_call.1} parent=1 // pred_region
      %634 = dma.done [#allocation4], 32
    $region17: #{tpu_custom_call.1} parent=1 // pred_fallthru
      _
    %635 = vsyncpa [#allocation4], 1

</llo_original>
